<compile_context>
chip_gen: v7x
topology: tpu7x:2x2x1
jax: 0.10.0
libtpu: 0.0.40
codegen_flags: <defaults>
</compile_context>

<pallas_src>
import functools

import jax
import jax.numpy as jnp
from jax import lax
from jax.experimental import pallas as pl
from jax.experimental.pallas import tpu as pltpu

FEATURE_PYRAMID_CHANNELS = 12
PE_CHANNELS = 6
DECODER_INPUT_CHANNELS = FEATURE_PYRAMID_CHANNELS * 5 + PE_CHANNELS * 2 + 1  # 73
HIDDEN = 64
OUT = 3

_INV_SQRT2 = 0.7071067811865476
_SQRT_2_OVER_PI = 0.7978845608028654


def _cdiv(a, b):
    return -(-a // b)


def _round_up(x, m):
    return (x + m - 1) // m * m


def _gelu_erf(x):
    # PyTorch nn.GELU() default: exact erf GELU. Lowers to a VPU polynomial (VALU-heavy).
    return 0.5 * x * (1.0 + lax.erf(x * _INV_SQRT2))


def _gelu_tanh(x):
    # PyTorch nn.GELU(approximate='tanh'). tanh lowers to the EUP -> off the VALU slot.
    return 0.5 * x * (1.0 + jnp.tanh(_SQRT_2_OVER_PI * (x + 0.044715 * (x * x * x))))


_GELU_FNS = {"tanh": _gelu_tanh, "erf": _gelu_erf}


def _mlp_kernel(x_ref, w1_ref, b1_ref, w2_ref, b2_ref, w3_ref, b3_ref, o_ref, *, gelu_fn):
    # x streamed in f32, cast to bf16 only for the MXU; weights bf16; everything else f32.
    x = x_ref[...].astype(jnp.bfloat16)                                       # (T, 73)
    h = jnp.dot(x, w1_ref[...], preferred_element_type=jnp.float32)          # (T, 64) f32
    h = gelu_fn(h + b1_ref[...])
    h = jnp.dot(h.astype(jnp.bfloat16), w2_ref[...],
                preferred_element_type=jnp.float32)                          # (T, 64) f32
    h = gelu_fn(h + b2_ref[...])
    h = jnp.dot(h.astype(jnp.bfloat16), w3_ref[...],
                preferred_element_type=jnp.float32)                          # (T, 3) f32
    o_ref[...] = jax.nn.sigmoid(h + b3_ref[...]).astype(o_ref.dtype)


def color_decoder_forward(x, params, *, tile_n=1024, gelu="tanh"):
    """x: (N, 73) float32. Returns (N, 3) float32.

    gelu="tanh" (default): tanh-GELU on the EUP (fast; matches nn.GELU(approximate='tanh')).
    gelu="erf": exact-erf GELU (matches PyTorch nn.GELU() default, more VALU work).
    """
    n, c = x.shape
    assert c == DECODER_INPUT_CHANNELS
    gelu_fn = _GELU_FNS[gelu]

    # Row tile: multiple of 128 (layout-friendly), capped so (a) it never exceeds the padded
    # input and (b) the grid has >= 2 steps whenever N > 128, keeping both v7x cores busy.
    tile = min(_round_up(int(tile_n), 128),
               _round_up(n, 128),
               _round_up(_cdiv(n, 2), 128))
    n_pad = _round_up(n, tile)
    if n_pad != n:
        x = jnp.pad(x, ((0, n_pad - n), (0, 0)))

    x = x.astype(jnp.float32)
    w1 = params["w1"].astype(jnp.bfloat16)
    w2 = params["w2"].astype(jnp.bfloat16)
    w3 = params["w3"].astype(jnp.bfloat16)
    b1 = params["b1"].astype(jnp.float32)
    b2 = params["b2"].astype(jnp.float32)
    b3 = params["b3"].astype(jnp.float32)

    grid = (n_pad // tile,)
    full = lambda i: (0, 0)  # weights/biases: the same (whole) block every grid step

    weight_bytes = (w1.size + w2.size + w3.size) * 2 + (b1.size + b2.size + b3.size) * 4
    cost = pl.CostEstimate(
        flops=2 * n_pad * (c * HIDDEN + HIDDEN * HIDDEN + HIDDEN * OUT),
        transcendentals=n_pad * (2 * HIDDEN + OUT),          # 2 GELUs + sigmoid per row
        bytes_accessed=n_pad * c * 4 + n_pad * OUT * 4 + weight_bytes,
    )

    out = pl.pallas_call(
        functools.partial(_mlp_kernel, gelu_fn=gelu_fn),
        out_shape=jax.ShapeDtypeStruct((n_pad, OUT), jnp.float32),
        grid_spec=pltpu.PrefetchScalarGridSpec(
            num_scalar_prefetch=0,
            grid=grid,
            in_specs=[
                pl.BlockSpec((tile, c), lambda i: (i, 0)),
                pl.BlockSpec((c, HIDDEN), full),
                pl.BlockSpec((1, HIDDEN), full),
                pl.BlockSpec((HIDDEN, HIDDEN), full),
                pl.BlockSpec((1, HIDDEN), full),
                pl.BlockSpec((HIDDEN, OUT), full),
                pl.BlockSpec((1, OUT), full),
            ],
            out_specs=pl.BlockSpec((tile, OUT), lambda i: (i, 0)),
        ),
        compiler_params=pltpu.CompilerParams(
            dimension_semantics=("parallel",)),  # row-tile axis shards across TCs on v7x
        cost_estimate=cost,
    )(x, w1, b1, w2, b2, w3, b3)

    return out[:n]


def init_params(key):
    """Init mimicking PyTorch nn.Linear default U(-1/sqrt(fan_in), +1/sqrt(fan_in)).
    Weights stored transposed as (in, out) so the kernel computes x @ W + b."""
    def linear(k, fan_in, fan_out):
        kw, kb = jax.random.split(k)
        bound = 1.0 / jnp.sqrt(jnp.float32(fan_in))
        w = jax.random.uniform(kw, (fan_in, fan_out), jnp.float32, -bound, bound)
        b = jax.random.uniform(kb, (1, fan_out), jnp.float32, -bound, bound)
        return w, b

    k1, k2, k3 = jax.random.split(key, 3)
    w1, b1 = linear(k1, DECODER_INPUT_CHANNELS, HIDDEN)
    w2, b2 = linear(k2, HIDDEN, HIDDEN)
    w3, b3 = linear(k3, HIDDEN, OUT)
    return {"w1": w1, "b1": b1, "w2": w2, "b2": b2, "w3": w3, "b3": b3}


def _reference_forward_f32(x, p):
    # Module semantics: full-f32, exact-erf GELU (PyTorch nn.GELU() default).
    h = _gelu_erf(x @ p["w1"] + p["b1"])
    h = _gelu_erf(h @ p["w2"] + p["b2"])
    return jax.nn.sigmoid(h @ p["w3"] + p["b3"])


def _reference_forward_same_recipe(x, p, gelu_fn):
    # Same precision recipe as the kernel: bf16 matmul operands, f32 accumulate/activations.
    xb = x.astype(jnp.bfloat16)
    w1 = p["w1"].astype(jnp.bfloat16)
    w2 = p["w2"].astype(jnp.bfloat16)
    w3 = p["w3"].astype(jnp.bfloat16)
    h = gelu_fn(jnp.dot(xb, w1, preferred_element_type=jnp.float32) + p["b1"])
    h = gelu_fn(jnp.dot(h.astype(jnp.bfloat16), w2, preferred_element_type=jnp.float32) + p["b2"])
    h = jnp.dot(h.astype(jnp.bfloat16), w3, preferred_element_type=jnp.float32) + p["b3"]
    return jax.nn.sigmoid(h)


if __name__ == "__main__":
    key = jax.random.PRNGKey(0)
    k_param, k_x = jax.random.split(key)
    params = init_params(k_param)

    N = 256  # e.g. 2 images x 128 sampled pixels, flattened to rows (small demo shape)
    x = jax.random.normal(k_x, (N, DECODER_INPUT_CHANNELS), jnp.float32)

    # Default (tanh-GELU / EUP) path. tile auto-caps to 128 rows -> 2 grid steps here.
    out = color_decoder_forward(x, params)
    out = jax.block_until_ready(out)
    assert out.shape == (N, OUT)

    # Check 1: tight, against a JAX reference using the SAME precision/GELU recipe.
    ref_same = _reference_forward_same_recipe(x, params, _gelu_tanh)
    assert jnp.allclose(out, ref_same, rtol=2e-3, atol=2e-3), "mismatch vs same-recipe reference"

    # Check 2: against the full-f32 exact-erf reference (module semantics); tolerance loosened
    # for bf16 matmul operands + tanh-GELU approximation.
    ref_f32 = _reference_forward_f32(x, params)
    assert jnp.allclose(out, ref_f32, rtol=5e-2, atol=2e-2), "mismatch vs f32/erf reference"

    # Check 3: exact-erf kernel path (strict nn.GELU() semantics), same f32 reference.
    out_erf = jax.block_until_ready(color_decoder_forward(x, params, gelu="erf"))
    assert jnp.allclose(out_erf, ref_f32, rtol=5e-2, atol=2e-2), "mismatch vs f32 reference (erf path)"

    print("KERNEL_OK")
</pallas_src>

<mosaic_0001>
module attributes {stable_mosaic.version = 11 : i64} {
  func.func @_mlp_kernel(%arg0: i32, %arg1: memref<128x73xf32, #tpu.memory_space<vmem>>, %arg2: memref<73x64xbf16, #tpu.memory_space<vmem>>, %arg3: memref<1x64xf32, #tpu.memory_space<vmem>>, %arg4: memref<64x64xbf16, #tpu.memory_space<vmem>>, %arg5: memref<1x64xf32, #tpu.memory_space<vmem>>, %arg6: memref<64x3xbf16, #tpu.memory_space<vmem>>, %arg7: memref<1x3xf32, #tpu.memory_space<vmem>>, %arg8: memref<128x3xf32, #tpu.memory_space<vmem>>) attributes {dimension_semantics = [#tpu.dimension_semantics<parallel>], iteration_bounds = array<i64: 2>, scalar_prefetch = 0 : i64, scratch_operands = 0 : i64, tpu.core_type = #tpu.core_type<tc>, window_params = [{transform_indices = @transform_0, window_bounds = array<i64: 128, 73>}, {pipeline_mode = #tpu.pipeline_mode<synchronous>, transform_indices = @transform_1, window_bounds = array<i64: 73, 64>}, {pipeline_mode = #tpu.pipeline_mode<synchronous>, transform_indices = @transform_2, window_bounds = array<i64: 1, 64>}, {pipeline_mode = #tpu.pipeline_mode<synchronous>, transform_indices = @transform_3, window_bounds = array<i64: 64, 64>}, {pipeline_mode = #tpu.pipeline_mode<synchronous>, transform_indices = @transform_4, window_bounds = array<i64: 1, 64>}, {pipeline_mode = #tpu.pipeline_mode<synchronous>, transform_indices = @transform_5, window_bounds = array<i64: 64, 3>}, {pipeline_mode = #tpu.pipeline_mode<synchronous>, transform_indices = @transform_6, window_bounds = array<i64: 1, 3>}, {transform_indices = @transform_7, window_bounds = array<i64: 128, 3>}]} {
    %c0 = arith.constant 0 : index
    %c0_0 = arith.constant 0 : index
    %0 = vector.load %arg1[%c0, %c0_0] : memref<128x73xf32, #tpu.memory_space<vmem>>, vector<128x73xf32>
    %1 = arith.truncf %0 : vector<128x73xf32> to vector<128x73xbf16>
    %c0_1 = arith.constant 0 : index
    %c0_2 = arith.constant 0 : index
    %2 = vector.load %arg2[%c0_1, %c0_2] : memref<73x64xbf16, #tpu.memory_space<vmem>>, vector<73x64xbf16>
    %cst = arith.constant dense<0.000000e+00> : vector<128x64xf32>
    %3 = tpu.matmul %1, %2, %cst {dimension_numbers = #tpu.dot_dimension_numbers<[1], [0], [0], [1], [0, 0, 1, 1], [], []>} : vector<128x73xbf16>, vector<73x64xbf16>, vector<128x64xf32> -> vector<128x64xf32>
    %c0_3 = arith.constant 0 : index
    %c0_4 = arith.constant 0 : index
    %4 = vector.load %arg3[%c0_3, %c0_4] : memref<1x64xf32, #tpu.memory_space<vmem>>, vector<1x64xf32>
    %5 = vector.broadcast %4 : vector<1x64xf32> to vector<128x64xf32>
    %6 = arith.addf %3, %5 : vector<128x64xf32>
    %cst_5 = arith.constant 5.000000e-01 : f32
    %7 = vector.broadcast %cst_5 : f32 to vector<128x64xf32>
    %8 = arith.mulf %7, %6 : vector<128x64xf32>
    %9 = arith.mulf %6, %6 : vector<128x64xf32>
    %10 = arith.mulf %9, %6 : vector<128x64xf32>
    %cst_6 = arith.constant 4.471500e-02 : f32
    %11 = vector.broadcast %cst_6 : f32 to vector<128x64xf32>
    %12 = arith.mulf %11, %10 : vector<128x64xf32>
    %13 = arith.addf %6, %12 : vector<128x64xf32>
    %cst_7 = arith.constant 0.797884583 : f32
    %14 = vector.broadcast %cst_7 : f32 to vector<128x64xf32>
    %15 = arith.mulf %14, %13 : vector<128x64xf32>
    %16 = math.tanh %15 : vector<128x64xf32>
    %cst_8 = arith.constant 1.000000e+00 : f32
    %17 = vector.broadcast %cst_8 : f32 to vector<128x64xf32>
    %18 = arith.addf %17, %16 : vector<128x64xf32>
    %19 = arith.mulf %8, %18 : vector<128x64xf32>
    %20 = arith.truncf %19 : vector<128x64xf32> to vector<128x64xbf16>
    %c0_9 = arith.constant 0 : index
    %c0_10 = arith.constant 0 : index
    %21 = vector.load %arg4[%c0_9, %c0_10] : memref<64x64xbf16, #tpu.memory_space<vmem>>, vector<64x64xbf16>
    %cst_11 = arith.constant dense<0.000000e+00> : vector<128x64xf32>
    %22 = tpu.matmul %20, %21, %cst_11 {dimension_numbers = #tpu.dot_dimension_numbers<[1], [0], [0], [1], [0, 0, 1, 1], [], []>} : vector<128x64xbf16>, vector<64x64xbf16>, vector<128x64xf32> -> vector<128x64xf32>
    %c0_12 = arith.constant 0 : index
    %c0_13 = arith.constant 0 : index
    %23 = vector.load %arg5[%c0_12, %c0_13] : memref<1x64xf32, #tpu.memory_space<vmem>>, vector<1x64xf32>
    %24 = vector.broadcast %23 : vector<1x64xf32> to vector<128x64xf32>
    %25 = arith.addf %22, %24 : vector<128x64xf32>
    %cst_14 = arith.constant 5.000000e-01 : f32
    %26 = vector.broadcast %cst_14 : f32 to vector<128x64xf32>
    %27 = arith.mulf %26, %25 : vector<128x64xf32>
    %28 = arith.mulf %25, %25 : vector<128x64xf32>
    %29 = arith.mulf %28, %25 : vector<128x64xf32>
    %cst_15 = arith.constant 4.471500e-02 : f32
    %30 = vector.broadcast %cst_15 : f32 to vector<128x64xf32>
    %31 = arith.mulf %30, %29 : vector<128x64xf32>
    %32 = arith.addf %25, %31 : vector<128x64xf32>
    %cst_16 = arith.constant 0.797884583 : f32
    %33 = vector.broadcast %cst_16 : f32 to vector<128x64xf32>
    %34 = arith.mulf %33, %32 : vector<128x64xf32>
    %35 = math.tanh %34 : vector<128x64xf32>
    %cst_17 = arith.constant 1.000000e+00 : f32
    %36 = vector.broadcast %cst_17 : f32 to vector<128x64xf32>
    %37 = arith.addf %36, %35 : vector<128x64xf32>
    %38 = arith.mulf %27, %37 : vector<128x64xf32>
    %39 = arith.truncf %38 : vector<128x64xf32> to vector<128x64xbf16>
    %c0_18 = arith.constant 0 : index
    %c0_19 = arith.constant 0 : index
    %40 = vector.load %arg6[%c0_18, %c0_19] : memref<64x3xbf16, #tpu.memory_space<vmem>>, vector<64x3xbf16>
    %cst_20 = arith.constant dense<0.000000e+00> : vector<128x3xf32>
    %41 = tpu.matmul %39, %40, %cst_20 {dimension_numbers = #tpu.dot_dimension_numbers<[1], [0], [0], [1], [0, 0, 1, 1], [], []>} : vector<128x64xbf16>, vector<64x3xbf16>, vector<128x3xf32> -> vector<128x3xf32>
    %c0_21 = arith.constant 0 : index
    %c0_22 = arith.constant 0 : index
    %42 = vector.load %arg7[%c0_21, %c0_22] : memref<1x3xf32, #tpu.memory_space<vmem>>, vector<1x3xf32>
    %43 = vector.broadcast %42 : vector<1x3xf32> to vector<128x3xf32>
    %44 = arith.addf %41, %43 : vector<128x3xf32>
    %45 = arith.negf %44 : vector<128x3xf32>
    %46 = math.exp %45 : vector<128x3xf32>
    %cst_23 = arith.constant 1.000000e+00 : f32
    %47 = vector.broadcast %cst_23 : f32 to vector<128x3xf32>
    %48 = arith.addf %47, %46 : vector<128x3xf32>
    %49 = arith.divf %47, %48 : vector<128x3xf32>
    %c0_24 = arith.constant 0 : index
    %c0_25 = arith.constant 0 : index
    %50 = vector.load %arg8[%c0_24, %c0_25] : memref<128x3xf32, #tpu.memory_space<vmem>>, vector<128x3xf32>
    tpu.vector_store %arg8[%c0_24, %c0_25], %49 {strides = array<i32>} : memref<128x3xf32, #tpu.memory_space<vmem>>, vector<128x3xf32>,
    return
  }
  func.func @transform_0(%arg0: i32) -> (i32, i32) {
    %c0_i32 = arith.constant 0 : i32
    %c0_i32_0 = arith.constant 0 : i32
    return %arg0, %c0_i32 : i32, i32
  }
  func.func @transform_1(%arg0: i32) -> (i32, i32) {
    %c0_i32 = arith.constant 0 : i32
    %c0_i32_0 = arith.constant 0 : i32
    %c0_i32_1 = arith.constant 0 : i32
    return %c0_i32, %c0_i32_0 : i32, i32
  }
  func.func @transform_2(%arg0: i32) -> (i32, i32) {
    %c0_i32 = arith.constant 0 : i32
    %c0_i32_0 = arith.constant 0 : i32
    %c0_i32_1 = arith.constant 0 : i32
    return %c0_i32, %c0_i32_0 : i32, i32
  }
  func.func @transform_3(%arg0: i32) -> (i32, i32) {
    %c0_i32 = arith.constant 0 : i32
    %c0_i32_0 = arith.constant 0 : i32
    %c0_i32_1 = arith.constant 0 : i32
    return %c0_i32, %c0_i32_0 : i32, i32
  }
  func.func @transform_4(%arg0: i32) -> (i32, i32) {
    %c0_i32 = arith.constant 0 : i32
    %c0_i32_0 = arith.constant 0 : i32
    %c0_i32_1 = arith.constant 0 : i32
    return %c0_i32, %c0_i32_0 : i32, i32
  }
  func.func @transform_5(%arg0: i32) -> (i32, i32) {
    %c0_i32 = arith.constant 0 : i32
    %c0_i32_0 = arith.constant 0 : i32
    %c0_i32_1 = arith.constant 0 : i32
    return %c0_i32, %c0_i32_0 : i32, i32
  }
  func.func @transform_6(%arg0: i32) -> (i32, i32) {
    %c0_i32 = arith.constant 0 : i32
    %c0_i32_0 = arith.constant 0 : i32
    %c0_i32_1 = arith.constant 0 : i32
    return %c0_i32, %c0_i32_0 : i32, i32
  }
  func.func @transform_7(%arg0: i32) -> (i32, i32) {
    %c0_i32 = arith.constant 0 : i32
    %c0_i32_0 = arith.constant 0 : i32
    return %arg0, %c0_i32 : i32, i32
  }
}

</mosaic_0001>

<llo_original>
// kernel: tpu_custom_call.1
$region0: #{tpu_custom_call.1}
  #allocation0 [shape = 'u32[]', space=smem, size = 0x4, offset = 0x4, fixed_abs, tag = 'smem constant byte address 0x4 - core index']
  #allocation1 [shape = 'u32[144,128]{1,0:T(1,128)}', space=vmem, size = 0x12000, scoped, tag = 'internal scratch']
  %s0 = inlined_call_operand.vmem [shape: f32[256,73], index: 0, kind: input, shape index: {}]
  %s1 = inlined_call_operand.vmem [shape: bf16[73,64], index: 1, kind: input, shape index: {}]
  %s2 = inlined_call_operand.vmem [shape: f32[1,64], index: 2, kind: input, shape index: {}]
  %s3 = inlined_call_operand.vmem [shape: bf16[64,64], index: 3, kind: input, shape index: {}]
  %s4 = inlined_call_operand.vmem [shape: f32[1,64], index: 4, kind: input, shape index: {}]
  %s5 = inlined_call_operand.vmem [shape: bf16[64,3], index: 5, kind: input, shape index: {}]
  %s6 = inlined_call_operand.vmem [shape: f32[1,3], index: 6, kind: input, shape index: {}]
  %s7 = inlined_call_operand.vmem [shape: f32[256,3], index: 7, kind: output, shape index: {}]
  %s8 = sld [smem:[#allocation0]]
  $region61: #{tpu_custom_call.1} parent=0
    _
  %s10 = ssub.s32 1, %s8
  %s11 = scalar_select 0, %s10, %s8
  loop: start=0, step=1, limit=4
  $region2: #{tpu_custom_call.1} parent=0 // loop_pre_header
    _
  $region3: #{tpu_custom_call.1} parent=0 // loop_header
    %s13 = sphi 0, %s17
    %p14 = scmp.ge.s32.totalorder %s13, 4
    %s23 = sphi 0, %s25
    %s26 = sphi 0, %s23
    %s27 = sphi 0, %s26
    %s43 = sphi 0, %s27
    %s47 = sphi 0, %s47
    %s49 = sphi 0, %s47
    %s50 = sphi 0, %s49
    %s64 = sphi 0, %s50
    %s68 = sphi 0, %s68
    %s70 = sphi 0, %s68
    %s71 = sphi 0, %s70
    %s85 = sphi 0, %s71
    %s89 = sphi 0, %s89
    %s91 = sphi 0, %s89
    %s92 = sphi 0, %s91
    %s106 = sphi 0, %s92
    %s110 = sphi 0, %s110
    %s112 = sphi 0, %s110
    %s113 = sphi 0, %s112
    %s127 = sphi 0, %s113
    %s131 = sphi 0, %s131
    %s133 = sphi 0, %s131
    %s134 = sphi 0, %s133
    %s148 = sphi 0, %s134
    %s152 = sphi 0, %s152
    %s154 = sphi 0, %s152
    %s155 = sphi 0, %s154
    %s169 = sphi 0, %s155
    %s175 = sphi 0, %s177
    %s178 = sphi 0, %s175
    %s179 = sphi 0, %s178
    %s195 = sphi 0, %s179
  $region4: #{tpu_custom_call.1} parent=0 // loop_header_branch
    %16 = sbr.rel (%p14) target = $region8
  $region5: #{tpu_custom_call.1} parent=0 // loop_body
    %s18 = ssub.s32 %s13, 1
    %s19 = ssub.s32 %s13, 2
    %s20 = sadd.s32 %s13, 1
    %s21 = ssub.s32 %s13, %s20
    %p22 = scmp.eq.s32.totalorder %s21, 0
    %s24 = sadd.s32 %s23, 1
    %s25 = scalar_select %p22, %s23, %s24
    %p28 = pneg %p22
    %p29 = scmp.eq.s32.totalorder %s13, 1
    %p30 = por %p28, %p29
    %p31 = scmp.ne.s32.totalorder %s23, %s26
    %p32 = scmp.eq.s32.totalorder %s13, 0
    %p33 = por %p31, %p32
    %p34 = scmp.ne.s32.totalorder %s23, %s26
    %p35 = scmp.eq.s32.totalorder %s18, 1
    %p36 = por %p34, %p35
    %p37 = scmp.ne.s32.totalorder %s26, %s27
    %p38 = scmp.eq.s32.totalorder %s18, 0
    %p39 = por %p37, %p38
    %p40 = scmp.ne.s32.totalorder %s26, %s27
    %p41 = scmp.eq.s32.totalorder %s19, 1
    %p42 = por %p40, %p41
    %p44 = scmp.ne.s32.totalorder %s27, %s43
    %p45 = scmp.eq.s32.totalorder %s19, 0
    %p46 = por %p44, %p45
    %s48 = sadd.s32 %s47, 1
    %p51 = scmp.eq.s32.totalorder %s13, 1
    %p52 = scmp.ne.s32.totalorder %s47, %s49
    %p53 = scmp.eq.s32.totalorder %s13, 0
    %p54 = por %p52, %p53
    %p55 = scmp.ne.s32.totalorder %s47, %s49
    %p56 = scmp.eq.s32.totalorder %s18, 1
    %p57 = por %p55, %p56
    %p58 = scmp.ne.s32.totalorder %s49, %s50
    %p59 = scmp.eq.s32.totalorder %s18, 0
    %p60 = por %p58, %p59
    %p61 = scmp.ne.s32.totalorder %s49, %s50
    %p62 = scmp.eq.s32.totalorder %s19, 1
    %p63 = por %p61, %p62
    %p65 = scmp.ne.s32.totalorder %s50, %s64
    %p66 = scmp.eq.s32.totalorder %s19, 0
    %p67 = por %p65, %p66
    %s69 = sadd.s32 %s68, 1
    %p72 = scmp.eq.s32.totalorder %s13, 1
    %p73 = scmp.ne.s32.totalorder %s68, %s70
    %p74 = scmp.eq.s32.totalorder %s13, 0
    %p75 = por %p73, %p74
    %p76 = scmp.ne.s32.totalorder %s68, %s70
    %p77 = scmp.eq.s32.totalorder %s18, 1
    %p78 = por %p76, %p77
    %p79 = scmp.ne.s32.totalorder %s70, %s71
    %p80 = scmp.eq.s32.totalorder %s18, 0
    %p81 = por %p79, %p80
    %p82 = scmp.ne.s32.totalorder %s70, %s71
    %p83 = scmp.eq.s32.totalorder %s19, 1
    %p84 = por %p82, %p83
    %p86 = scmp.ne.s32.totalorder %s71, %s85
    %p87 = scmp.eq.s32.totalorder %s19, 0
    %p88 = por %p86, %p87
    %s90 = sadd.s32 %s89, 1
    %p93 = scmp.eq.s32.totalorder %s13, 1
    %p94 = scmp.ne.s32.totalorder %s89, %s91
    %p95 = scmp.eq.s32.totalorder %s13, 0
    %p96 = por %p94, %p95
    %p97 = scmp.ne.s32.totalorder %s89, %s91
    %p98 = scmp.eq.s32.totalorder %s18, 1
    %p99 = por %p97, %p98
    %p100 = scmp.ne.s32.totalorder %s91, %s92
    %p101 = scmp.eq.s32.totalorder %s18, 0
    %p102 = por %p100, %p101
    %p103 = scmp.ne.s32.totalorder %s91, %s92
    %p104 = scmp.eq.s32.totalorder %s19, 1
    %p105 = por %p103, %p104
    %p107 = scmp.ne.s32.totalorder %s92, %s106
    %p108 = scmp.eq.s32.totalorder %s19, 0
    %p109 = por %p107, %p108
    %s111 = sadd.s32 %s110, 1
    %p114 = scmp.eq.s32.totalorder %s13, 1
    %p115 = scmp.ne.s32.totalorder %s110, %s112
    %p116 = scmp.eq.s32.totalorder %s13, 0
    %p117 = por %p115, %p116
    %p118 = scmp.ne.s32.totalorder %s110, %s112
    %p119 = scmp.eq.s32.totalorder %s18, 1
    %p120 = por %p118, %p119
    %p121 = scmp.ne.s32.totalorder %s112, %s113
    %p122 = scmp.eq.s32.totalorder %s18, 0
    %p123 = por %p121, %p122
    %p124 = scmp.ne.s32.totalorder %s112, %s113
    %p125 = scmp.eq.s32.totalorder %s19, 1
    %p126 = por %p124, %p125
    %p128 = scmp.ne.s32.totalorder %s113, %s127
    %p129 = scmp.eq.s32.totalorder %s19, 0
    %p130 = por %p128, %p129
    %s132 = sadd.s32 %s131, 1
    %p135 = scmp.eq.s32.totalorder %s13, 1
    %p136 = scmp.ne.s32.totalorder %s131, %s133
    %p137 = scmp.eq.s32.totalorder %s13, 0
    %p138 = por %p136, %p137
    %p139 = scmp.ne.s32.totalorder %s131, %s133
    %p140 = scmp.eq.s32.totalorder %s18, 1
    %p141 = por %p139, %p140
    %p142 = scmp.ne.s32.totalorder %s133, %s134
    %p143 = scmp.eq.s32.totalorder %s18, 0
    %p144 = por %p142, %p143
    %p145 = scmp.ne.s32.totalorder %s133, %s134
    %p146 = scmp.eq.s32.totalorder %s19, 1
    %p147 = por %p145, %p146
    %p149 = scmp.ne.s32.totalorder %s134, %s148
    %p150 = scmp.eq.s32.totalorder %s19, 0
    %p151 = por %p149, %p150
    %s153 = sadd.s32 %s152, 1
    %p156 = scmp.eq.s32.totalorder %s13, 1
    %p157 = scmp.ne.s32.totalorder %s152, %s154
    %p158 = scmp.eq.s32.totalorder %s13, 0
    %p159 = por %p157, %p158
    %p160 = scmp.ne.s32.totalorder %s152, %s154
    %p161 = scmp.eq.s32.totalorder %s18, 1
    %p162 = por %p160, %p161
    %p163 = scmp.ne.s32.totalorder %s154, %s155
    %p164 = scmp.eq.s32.totalorder %s18, 0
    %p165 = por %p163, %p164
    %p166 = scmp.ne.s32.totalorder %s154, %s155
    %p167 = scmp.eq.s32.totalorder %s19, 1
    %p168 = por %p166, %p167
    %p170 = scmp.ne.s32.totalorder %s155, %s169
    %p171 = scmp.eq.s32.totalorder %s19, 0
    %p172 = por %p170, %p171
    %s173 = ssub.s32 %s13, %s20
    %p174 = scmp.eq.s32.totalorder %s173, 0
    %s176 = sadd.s32 %s175, 1
    %s177 = scalar_select %p174, %s175, %s176
    %p180 = pneg %p174
    %p181 = scmp.eq.s32.totalorder %s13, 1
    %p182 = por %p180, %p181
    %p183 = scmp.ne.s32.totalorder %s175, %s178
    %p184 = scmp.eq.s32.totalorder %s13, 0
    %p185 = por %p183, %p184
    %p186 = scmp.ne.s32.totalorder %s175, %s178
    %p187 = scmp.eq.s32.totalorder %s18, 1
    %p188 = por %p186, %p187
    %p189 = scmp.ne.s32.totalorder %s178, %s179
    %p190 = scmp.eq.s32.totalorder %s18, 0
    %p191 = por %p189, %p190
    %p192 = scmp.ne.s32.totalorder %s178, %s179
    %p193 = scmp.eq.s32.totalorder %s19, 1
    %p194 = por %p192, %p193
    %p196 = scmp.ne.s32.totalorder %s179, %s195
    %p197 = scmp.eq.s32.totalorder %s19, 0
    %p198 = por %p196, %p197
    %p199 = scmp.le.s32.totalorder 1, %s13
    %p200 = scmp.lt.s32.totalorder %s13, 3
    %p201 = pnand %p199, %p200
    %p202 = pneg %p201
    // Predicated region
    $region9: #{tpu_custom_call.1} parent=5 // pred_check
      _
    $region10: #{tpu_custom_call.1} parent=5 // pred_check_branch
      %204 = sbr.rel (%p201) target = $region12
    $region11: #{tpu_custom_call.1} parent=5 // pred_region
      %s205 = ssub.s32 %s13, 1
      // Predicated region
      $region13: #{tpu_custom_call.1} parent=11 // pred_check
        %p206 = pneg %p60
      $region14: #{tpu_custom_call.1} parent=11 // pred_check_branch
        %208 = sbr.rel (%p206) target = $region16
      $region15: #{tpu_custom_call.1} parent=11 // pred_region
        _
      $region16: #{tpu_custom_call.1} parent=11 // pred_fallthru
        _
      // Predicated region
      $region17: #{tpu_custom_call.1} parent=11 // pred_check
        %p209 = pneg %p81
      $region18: #{tpu_custom_call.1} parent=11 // pred_check_branch
        %211 = sbr.rel (%p209) target = $region20
      $region19: #{tpu_custom_call.1} parent=11 // pred_region
        _
      $region20: #{tpu_custom_call.1} parent=11 // pred_fallthru
        _
      // Predicated region
      $region21: #{tpu_custom_call.1} parent=11 // pred_check
        %p212 = pneg %p102
      $region22: #{tpu_custom_call.1} parent=11 // pred_check_branch
        %214 = sbr.rel (%p212) target = $region24
      $region23: #{tpu_custom_call.1} parent=11 // pred_region
        _
      $region24: #{tpu_custom_call.1} parent=11 // pred_fallthru
        _
      // Predicated region
      $region25: #{tpu_custom_call.1} parent=11 // pred_check
        %p215 = pneg %p123
      $region26: #{tpu_custom_call.1} parent=11 // pred_check_branch
        %217 = sbr.rel (%p215) target = $region28
      $region27: #{tpu_custom_call.1} parent=11 // pred_region
        _
      $region28: #{tpu_custom_call.1} parent=11 // pred_fallthru
        _
      // Predicated region
      $region29: #{tpu_custom_call.1} parent=11 // pred_check
        %p218 = pneg %p144
      $region30: #{tpu_custom_call.1} parent=11 // pred_check_branch
        %220 = sbr.rel (%p218) target = $region32
      $region31: #{tpu_custom_call.1} parent=11 // pred_region
        _
      $region32: #{tpu_custom_call.1} parent=11 // pred_fallthru
        _
      // Predicated region
      $region33: #{tpu_custom_call.1} parent=11 // pred_check
        %p221 = pneg %p165
      $region34: #{tpu_custom_call.1} parent=11 // pred_check_branch
        %223 = sbr.rel (%p221) target = $region36
      $region35: #{tpu_custom_call.1} parent=11 // pred_region
        _
      $region36: #{tpu_custom_call.1} parent=11 // pred_fallthru
        _
    $region12: #{tpu_custom_call.1} parent=5 // pred_fallthru
      _
    %p224 = scmp.lt.s32.totalorder %s13, 2
    // Predicated region
    $region37: #{tpu_custom_call.1} parent=5 // pred_check
      %p225 = pneg %p224
    $region38: #{tpu_custom_call.1} parent=5 // pred_check_branch
      %227 = sbr.rel (%p225) target = $region40
    $region39: #{tpu_custom_call.1} parent=5 // pred_region
      // Predicated region
      $region41: #{tpu_custom_call.1} parent=39 // pred_check
        %p228 = pneg %p33
      $region42: #{tpu_custom_call.1} parent=39 // pred_check_branch
        %230 = sbr.rel (%p228) target = $region44
      $region43: #{tpu_custom_call.1} parent=39 // pred_region
        %s231 = smul.u32 16, %s13
        %p232 = scmp.lt.s32.totalorder %s231, 31
        %s233 = scalar_select %p232, %s231, 31
        %s234 = smul.addr %s233, 8
        %s235 = scalar_lea.vmem %s0, %s234
        %s236 = smul.u32 16, %s13
      $region44: #{tpu_custom_call.1} parent=39 // pred_fallthru
        _
    $region40: #{tpu_custom_call.1} parent=5 // pred_fallthru
      _
    %p237 = scmp.le.s32.totalorder 1, %s13
    %p238 = scmp.lt.s32.totalorder %s13, 3
    %p239 = pnand %p237, %p238
    %p240 = pneg %p239
    // Predicated region
    $region45: #{tpu_custom_call.1} parent=5 // pred_check
      _
    $region46: #{tpu_custom_call.1} parent=5 // pred_check_branch
      %242 = sbr.rel (%p239) target = $region48
    $region47: #{tpu_custom_call.1} parent=5 // pred_region
      %s243 = ssub.s32 %s13, 1
      %s244 = smul.u32 16, %s18
      %p245 = scmp.lt.s32.totalorder %s244, 31
      %s246 = scalar_select %p245, %s244, 31
      %s247 = smul.addr %s246, 8
      %s248 = scalar_lea.vmem %s0, %s247
      %p249 = pneg %p39
      %p250 = pneg %p36
      %p251 = pneg %p60
      %p252 = pneg %p57
      %p253 = pneg %p81
      %p254 = pneg %p78
      %p255 = pneg %p102
      %p256 = pneg %p99
      %p257 = pneg %p123
      %p258 = pneg %p120
      %p259 = pneg %p144
      %p260 = pneg %p141
      %p261 = pneg %p165
      %p262 = pneg %p162
      %p263 = pneg %p191
      %p264 = pneg %p188
      %s265 = smul.u32 16, %s18
      %p266 = scmp.lt.s32.totalorder %s265, 31
      %s267 = scalar_select %p266, %s265, 31
      %s268 = smul.addr %s267, 8
      %s269 = scalar_lea.vmem %s7, %s268
      %s270 = smul.u32 16, %s18
      %p271 = scmp.lt.s32.totalorder %s270, 31
      %s272 = scalar_select %p271, %s270, 31
      %s273 = smul.addr %s272, 8
      %s274 = scalar_lea.vmem %s0, %s273
      %s275 = smul.u32 16, %s18
      %s276 = smul.u32 16, %s18
      %p277 = scmp.lt.s32.totalorder %s276, 31
      %s278 = scalar_select %p277, %s276, 31
      %s279 = smul.addr %s278, 8
      %s280 = scalar_lea.vmem %s7, %s279
      %s281 = smul.u32 16, %s18
      %v283 = vld [vmem:[%s274] sm:$0xff]
      %v284 = vld [vmem:[%s274 + $0x8] sm:$0xff]
      %v285 = vld [vmem:[%s274 + $0x10] sm:$0xff]
      %v286 = vld [vmem:[%s274 + $0x18] sm:$0xff]
      %v287 = vld [vmem:[%s274 + $0x20] sm:$0xff]
      %v288 = vld [vmem:[%s274 + $0x28] sm:$0xff]
      %v289 = vld [vmem:[%s274 + $0x30] sm:$0xff]
      %v290 = vld [vmem:[%s274 + $0x38] sm:$0xff]
      %v291 = vld [vmem:[%s274 + $0x40] sm:$0xff]
      %v292 = vld [vmem:[%s274 + $0x48] sm:$0xff]
      %v293 = vld [vmem:[%s274 + $0x50] sm:$0xff]
      %v294 = vld [vmem:[%s274 + $0x58] sm:$0xff]
      %v295 = vld [vmem:[%s274 + $0x60] sm:$0xff]
      %v296 = vld [vmem:[%s274 + $0x68] sm:$0xff]
      %v297 = vld [vmem:[%s274 + $0x70] sm:$0xff]
      %v298 = vld [vmem:[%s274 + $0x78] sm:$0xff]
      %v299 = vpack.c.bf16 %v284, %v283
      %v300 = vpack.c.bf16 %v286, %v285
      %v301 = vpack.c.bf16 %v288, %v287
      %v302 = vpack.c.bf16 %v290, %v289
      %v303 = vpack.c.bf16 %v292, %v291
      %v304 = vpack.c.bf16 %v294, %v293
      %v305 = vpack.c.bf16 %v296, %v295
      %v306 = vpack.c.bf16 %v298, %v297
      %v307 = vld [vmem:[%s1] sm:$0xf]
      %v308 = vld [vmem:[%s1 + $0x4] sm:$0xf]
      %v309 = vld [vmem:[%s1 + $0x8] sm:$0xf]
      %v310 = vld [vmem:[%s1 + $0xc] sm:$0xf]
      %v311 = vld [vmem:[%s1 + $0x10] sm:$0xf]
      %v312 = vld [vmem:[%s1 + $0x14] sm:$0xf]
      %v313 = vld [vmem:[%s1 + $0x18] sm:$0xf]
      %v314 = vld [vmem:[%s1 + $0x1c] sm:$0xf]
      %v315 = vld [vmem:[%s1 + $0x20] sm:$0xf]
      %v316 = vld [vmem:[%s1 + $0x24] sm:$0x1]
      %v317 = vld [vmem:[%s2] sm:$0x1]
      %v319 = vlaneseq
      %v320 = vshrl.u32 %v319, 7
      %v321 = vsub.s32 0, %v320
      %v322 = vrot.slane %v317, %v321
      %v334 = vunpack.c.l.b16 %v307
      %v335 = vunpack.c.l.b16 %v308
      %v336 = vunpack.c.l.b16 %v309
      %v337 = vunpack.c.l.b16 %v310
      %v338 = vunpack.c.l.b16 %v311
      %v339 = vunpack.c.l.b16 %v312
      %v340 = vunpack.c.l.b16 %v313
      %v341 = vunpack.c.l.b16 %v314
      %v342 = vunpack.c.l.b16 %v315
      %v343 = vunpack.c.l.b16 %v316
      %v344 = vpack.c.b16 %v335, %v334
      %v345 = vpack.c.b16 %v337, %v336
      %v346 = vpack.c.b16 %v339, %v338
      %v347 = vpack.c.b16 %v341, %v340
      %v348 = vpack.c.b16 %v343, %v342
      %vm353 = vcmask 596992
      %v355 = vsel %vm353, %v299, 0
      %v358 = vsel %vm353, %v300, 0
      %v361 = vsel %vm353, %v301, 0
      %v364 = vsel %vm353, %v302, 0
      %v367 = vsel %vm353, %v303, 0
      %v370 = vsel %vm353, %v304, 0
      %v373 = vsel %vm353, %v305, 0
      %v376 = vsel %vm353, %v306, 0
      %vm378 = vcmask 1043456
      %vm379 = vcmask 1044480
      %v380 = vsel %vm378, 4294967295, 65535
      %v381 = vsel %vm379, %v380, 0
      %v383 = vand.u32 %v348, %v381
      %385 = vmatprep.subr.bf16.mxu0 0
      %386 = vmatpush1.bf16.msra.mxu0 %v344
      %387 = vmatprep.subr.bf16.mxu0 0
      %388 = vmatpush1.bf16.msra.mxu0 %v345
      %389 = vmatprep.subr.bf16.mxu0 0
      %390 = vmatpush1.bf16.msra.mxu0 %v346
      %391 = vmatprep.subr.bf16.mxu0 0
      %392 = vmatpush1.bf16.msra.mxu0 %v347
      %393 = vmatprep.subr.bf16.mxu0 0
      %394 = vmatpush1.bf16.msra.mxu0 %v383
      %395 = vmatprep.subr.bf16.mxu0 0
      %396 = vmatpush1.bf16.msra.mxu0 0
      %397 = vmatprep.subr.bf16.mxu0 0
      %398 = vmatpush1.bf16.msra.mxu0 0
      %399 = vmatprep.subr.bf16.mxu0 0
      %400 = vmatpush1.bf16.msra.mxu0 0
      %401 = vmatprep.subr.bf16.mxu0 0
      %402 = vmatpush1.bf16.msra.mxu0 0
      %403 = vmatprep.subr.bf16.mxu0 0
      %404 = vmatpush1.bf16.msra.mxu0 0
      %405 = vmatprep.subr.bf16.mxu0 0
      %406 = vmatpush1.bf16.msra.mxu0 0
      %407 = vmatprep.subr.bf16.mxu0 0
      %408 = vmatpush1.bf16.msra.mxu0 0
      %409 = vmatprep.subr.bf16.mxu0 0
      %410 = vmatpush1.bf16.msra.mxu0 0
      %411 = vmatprep.subr.bf16.mxu0 0
      %412 = vmatpush1.bf16.msra.mxu0 0
      %413 = vmatprep.subr.bf16.mxu0 0
      %414 = vmatpush1.bf16.msra.mxu0 0
      %415 = vmatprep.subr.bf16.mxu0 0
      %416 = vmatpush1.bf16.msra.mxu0 0
      %417 = vmatprep.mubr.bf16.mxu0 0
      %418 = vmatmul.mubr.bf16.gmra.mrb[0].mxu0 %v355
      %v419 = vpop.f32.mrb[0].mxu0
      %v420 = vadd.f32 %v322, %v419
      %v421 = vpop.f32.mrb[0].mxu0
      %v422 = vpop.f32.mrb[0].mxu0
      %v423 = vadd.f32 %v322, %v422
      %v424 = vpop.f32.mrb[0].mxu0
      %425 = vmatprep.mubr.bf16.mxu0 0
      %426 = vmatmul.mubr.bf16.gmra.mrb[0].mxu0 %v358
      %v427 = vpop.f32.mrb[0].mxu0
      %v428 = vadd.f32 %v322, %v427
      %v429 = vpop.f32.mrb[0].mxu0
      %v430 = vpop.f32.mrb[0].mxu0
      %v431 = vadd.f32 %v322, %v430
      %v432 = vpop.f32.mrb[0].mxu0
      %433 = vmatprep.mubr.bf16.mxu0 0
      %434 = vmatmul.mubr.bf16.gmra.mrb[0].mxu0 %v361
      %v435 = vpop.f32.mrb[0].mxu0
      %v436 = vadd.f32 %v322, %v435
      %v437 = vpop.f32.mrb[0].mxu0
      %v438 = vpop.f32.mrb[0].mxu0
      %v439 = vadd.f32 %v322, %v438
      %v440 = vpop.f32.mrb[0].mxu0
      %441 = vmatprep.mubr.bf16.mxu0 0
      %442 = vmatmul.mubr.bf16.gmra.mrb[0].mxu0 %v364
      %v443 = vpop.f32.mrb[0].mxu0
      %v444 = vadd.f32 %v322, %v443
      %v445 = vpop.f32.mrb[0].mxu0
      %v446 = vpop.f32.mrb[0].mxu0
      %v447 = vadd.f32 %v322, %v446
      %v448 = vpop.f32.mrb[0].mxu0
      %449 = vmatprep.mubr.bf16.mxu0 0
      %450 = vmatmul.mubr.bf16.gmra.mrb[0].mxu0 %v367
      %v451 = vpop.f32.mrb[0].mxu0
      %v452 = vadd.f32 %v322, %v451
      %v453 = vpop.f32.mrb[0].mxu0
      %v454 = vpop.f32.mrb[0].mxu0
      %v455 = vadd.f32 %v322, %v454
      %v456 = vpop.f32.mrb[0].mxu0
      %457 = vmatprep.mubr.bf16.mxu0 0
      %458 = vmatmul.mubr.bf16.gmra.mrb[0].mxu0 %v370
      %v459 = vpop.f32.mrb[0].mxu0
      %v460 = vadd.f32 %v322, %v459
      %v461 = vpop.f32.mrb[0].mxu0
      %v462 = vpop.f32.mrb[0].mxu0
      %v463 = vadd.f32 %v322, %v462
      %v464 = vpop.f32.mrb[0].mxu0
      %465 = vmatprep.mubr.bf16.mxu0 0
      %466 = vmatmul.mubr.bf16.gmra.mrb[0].mxu0 %v373
      %v467 = vpop.f32.mrb[0].mxu0
      %v468 = vadd.f32 %v322, %v467
      %v469 = vpop.f32.mrb[0].mxu0
      %v470 = vpop.f32.mrb[0].mxu0
      %v471 = vadd.f32 %v322, %v470
      %v472 = vpop.f32.mrb[0].mxu0
      %473 = vmatprep.mubr.bf16.mxu0 0
      %474 = vmatmul.mubr.bf16.gmra.mrb[0].mxu0 %v376
      %v475 = vpop.f32.mrb[0].mxu0
      %v476 = vadd.f32 %v322, %v475
      %v477 = vpop.f32.mrb[0].mxu0
      %v478 = vpop.f32.mrb[0].mxu0
      %v479 = vadd.f32 %v322, %v478
      %v480 = vpop.f32.mrb[0].mxu0
      %481 = vdwg.mxu0
      %v482 = vmul.f32 %v420, 0.5
      %v483 = vmul.f32 %v423, 0.5
      %v484 = vmul.f32 %v428, 0.5
      %v485 = vmul.f32 %v431, 0.5
      %v486 = vmul.f32 %v436, 0.5
      %v487 = vmul.f32 %v439, 0.5
      %v488 = vmul.f32 %v444, 0.5
      %v489 = vmul.f32 %v447, 0.5
      %v490 = vmul.f32 %v452, 0.5
      %v491 = vmul.f32 %v455, 0.5
      %v492 = vmul.f32 %v460, 0.5
      %v493 = vmul.f32 %v463, 0.5
      %v494 = vmul.f32 %v468, 0.5
      %v495 = vmul.f32 %v471, 0.5
      %v496 = vmul.f32 %v476, 0.5
      %v497 = vmul.f32 %v479, 0.5
      %v498 = vmul.f32 %v420, %v420
      %v499 = vmul.f32 %v423, %v423
      %v500 = vmul.f32 %v428, %v428
      %v501 = vmul.f32 %v431, %v431
      %v502 = vmul.f32 %v436, %v436
      %v503 = vmul.f32 %v439, %v439
      %v504 = vmul.f32 %v444, %v444
      %v505 = vmul.f32 %v447, %v447
      %v506 = vmul.f32 %v452, %v452
      %v507 = vmul.f32 %v455, %v455
      %v508 = vmul.f32 %v460, %v460
      %v509 = vmul.f32 %v463, %v463
      %v510 = vmul.f32 %v468, %v468
      %v511 = vmul.f32 %v471, %v471
      %v512 = vmul.f32 %v476, %v476
      %v513 = vmul.f32 %v479, %v479
      %v514 = vmul.f32 %v498, %v420
      %v515 = vmul.f32 %v499, %v423
      %v516 = vmul.f32 %v500, %v428
      %v517 = vmul.f32 %v501, %v431
      %v518 = vmul.f32 %v502, %v436
      %v519 = vmul.f32 %v503, %v439
      %v520 = vmul.f32 %v504, %v444
      %v521 = vmul.f32 %v505, %v447
      %v522 = vmul.f32 %v506, %v452
      %v523 = vmul.f32 %v507, %v455
      %v524 = vmul.f32 %v508, %v460
      %v525 = vmul.f32 %v509, %v463
      %v526 = vmul.f32 %v510, %v468
      %v527 = vmul.f32 %v511, %v471
      %v528 = vmul.f32 %v512, %v476
      %v529 = vmul.f32 %v513, %v479
      %v530 = vmul.f32 %v514, 0.044715
      %v531 = vmul.f32 %v515, 0.044715
      %v532 = vmul.f32 %v516, 0.044715
      %v533 = vmul.f32 %v517, 0.044715
      %v534 = vmul.f32 %v518, 0.044715
      %v535 = vmul.f32 %v519, 0.044715
      %v536 = vmul.f32 %v520, 0.044715
      %v537 = vmul.f32 %v521, 0.044715
      %v538 = vmul.f32 %v522, 0.044715
      %v539 = vmul.f32 %v523, 0.044715
      %v540 = vmul.f32 %v524, 0.044715
      %v541 = vmul.f32 %v525, 0.044715
      %v542 = vmul.f32 %v526, 0.044715
      %v543 = vmul.f32 %v527, 0.044715
      %v544 = vmul.f32 %v528, 0.044715
      %v545 = vmul.f32 %v529, 0.044715
      %v546 = vadd.f32 %v420, %v530
      %v547 = vadd.f32 %v423, %v531
      %v548 = vadd.f32 %v428, %v532
      %v549 = vadd.f32 %v431, %v533
      %v550 = vadd.f32 %v436, %v534
      %v551 = vadd.f32 %v439, %v535
      %v552 = vadd.f32 %v444, %v536
      %v553 = vadd.f32 %v447, %v537
      %v554 = vadd.f32 %v452, %v538
      %v555 = vadd.f32 %v455, %v539
      %v556 = vadd.f32 %v460, %v540
      %v557 = vadd.f32 %v463, %v541
      %v558 = vadd.f32 %v468, %v542
      %v559 = vadd.f32 %v471, %v543
      %v560 = vadd.f32 %v476, %v544
      %v561 = vadd.f32 %v479, %v545
      %v562 = vmul.f32 %v546, 0.7978846
      %v563 = vmul.f32 %v547, 0.7978846
      %v564 = vmul.f32 %v548, 0.7978846
      %v565 = vmul.f32 %v549, 0.7978846
      %v566 = vmul.f32 %v550, 0.7978846
      %v567 = vmul.f32 %v551, 0.7978846
      %v568 = vmul.f32 %v552, 0.7978846
      %v569 = vmul.f32 %v553, 0.7978846
      %v570 = vmul.f32 %v554, 0.7978846
      %v571 = vmul.f32 %v555, 0.7978846
      %v572 = vmul.f32 %v556, 0.7978846
      %v573 = vmul.f32 %v557, 0.7978846
      %v574 = vmul.f32 %v558, 0.7978846
      %v575 = vmul.f32 %v559, 0.7978846
      %v576 = vmul.f32 %v560, 0.7978846
      %v577 = vmul.f32 %v561, 0.7978846
      %v578 = vtanh.pop %v562
      %v579 = vtanh.pop %v563
      %v580 = vtanh.pop %v564
      %v581 = vtanh.pop %v565
      %v582 = vtanh.pop %v566
      %v583 = vtanh.pop %v567
      %v584 = vtanh.pop %v568
      %v585 = vtanh.pop %v569
      %v586 = vtanh.pop %v570
      %v587 = vtanh.pop %v571
      %v588 = vtanh.pop %v572
      %v589 = vtanh.pop %v573
      %v590 = vtanh.pop %v574
      %v591 = vtanh.pop %v575
      %v592 = vtanh.pop %v576
      %v593 = vtanh.pop %v577
      %v594 = vadd.f32 %v578, 1.0
      %v595 = vadd.f32 %v579, 1.0
      %v596 = vadd.f32 %v580, 1.0
      %v597 = vadd.f32 %v581, 1.0
      %v598 = vadd.f32 %v582, 1.0
      %v599 = vadd.f32 %v583, 1.0
      %v600 = vadd.f32 %v584, 1.0
      %v601 = vadd.f32 %v585, 1.0
      %v602 = vadd.f32 %v586, 1.0
      %v603 = vadd.f32 %v587, 1.0
      %v604 = vadd.f32 %v588, 1.0
      %v605 = vadd.f32 %v589, 1.0
      %v606 = vadd.f32 %v590, 1.0
      %v607 = vadd.f32 %v591, 1.0
      %v608 = vadd.f32 %v592, 1.0
      %v609 = vadd.f32 %v593, 1.0
      %v610 = vmul.f32 %v482, %v594
      %v611 = vmul.f32 %v483, %v595
      %v612 = vmul.f32 %v484, %v596
      %v613 = vmul.f32 %v485, %v597
      %v614 = vmul.f32 %v486, %v598
      %v615 = vmul.f32 %v487, %v599
      %v616 = vmul.f32 %v488, %v600
      %v617 = vmul.f32 %v489, %v601
      %v618 = vmul.f32 %v490, %v602
      %v619 = vmul.f32 %v491, %v603
      %v620 = vmul.f32 %v492, %v604
      %v621 = vmul.f32 %v493, %v605
      %v622 = vmul.f32 %v494, %v606
      %v623 = vmul.f32 %v495, %v607
      %v624 = vmul.f32 %v496, %v608
      %v625 = vmul.f32 %v497, %v609
      %v626 = vpack.c.bf16 %v611, %v610
      %v627 = vpack.c.bf16 %v613, %v612
      %v628 = vpack.c.bf16 %v615, %v614
      %v629 = vpack.c.bf16 %v617, %v616
      %v630 = vpack.c.bf16 %v619, %v618
      %v631 = vpack.c.bf16 %v621, %v620
      %v632 = vpack.c.bf16 %v623, %v622
      %v633 = vpack.c.bf16 %v625, %v624
      %v634 = vld [vmem:[%s3] sm:$0xf]
      %v635 = vld [vmem:[%s3 + $0x4] sm:$0xf]
      %v636 = vld [vmem:[%s3 + $0x8] sm:$0xf]
      %v637 = vld [vmem:[%s3 + $0xc] sm:$0xf]
      %v638 = vld [vmem:[%s3 + $0x10] sm:$0xf]
      %v639 = vld [vmem:[%s3 + $0x14] sm:$0xf]
      %v640 = vld [vmem:[%s3 + $0x18] sm:$0xf]
      %v641 = vld [vmem:[%s3 + $0x1c] sm:$0xf]
      %v642 = vld [vmem:[%s4] sm:$0x1]
      %v644 = vlaneseq
      %v645 = vshrl.u32 %v644, 7
      %v646 = vsub.s32 0, %v645
      %v647 = vrot.slane %v642, %v646
      %v657 = vunpack.c.l.b16 %v634
      %v658 = vunpack.c.l.b16 %v635
      %v659 = vunpack.c.l.b16 %v636
      %v660 = vunpack.c.l.b16 %v637
      %v661 = vunpack.c.l.b16 %v638
      %v662 = vunpack.c.l.b16 %v639
      %v663 = vunpack.c.l.b16 %v640
      %v664 = vunpack.c.l.b16 %v641
      %v665 = vpack.c.b16 %v658, %v657
      %v666 = vpack.c.b16 %v660, %v659
      %v667 = vpack.c.b16 %v662, %v661
      %v668 = vpack.c.b16 %v664, %v663
      %vm673 = vcmask 523264
      %v675 = vsel %vm673, %v626, 0
      %v678 = vsel %vm673, %v627, 0
      %v681 = vsel %vm673, %v628, 0
      %v684 = vsel %vm673, %v629, 0
      %v687 = vsel %vm673, %v630, 0
      %v690 = vsel %vm673, %v631, 0
      %v693 = vsel %vm673, %v632, 0
      %v696 = vsel %vm673, %v633, 0
      %698 = vmatprep.subr.bf16.mxu0 0
      %699 = vmatpush1.bf16.msra.mxu0 %v665
      %700 = vmatprep.subr.bf16.mxu0 0
      %701 = vmatpush1.bf16.msra.mxu0 %v666
      %702 = vmatprep.subr.bf16.mxu0 0
      %703 = vmatpush1.bf16.msra.mxu0 %v667
      %704 = vmatprep.subr.bf16.mxu0 0
      %705 = vmatpush1.bf16.msra.mxu0 %v668
      %706 = vmatprep.subr.bf16.mxu0 0
      %707 = vmatpush1.bf16.msra.mxu0 0
      %708 = vmatprep.subr.bf16.mxu0 0
      %709 = vmatpush1.bf16.msra.mxu0 0
      %710 = vmatprep.subr.bf16.mxu0 0
      %711 = vmatpush1.bf16.msra.mxu0 0
      %712 = vmatprep.subr.bf16.mxu0 0
      %713 = vmatpush1.bf16.msra.mxu0 0
      %714 = vmatprep.subr.bf16.mxu0 0
      %715 = vmatpush1.bf16.msra.mxu0 0
      %716 = vmatprep.subr.bf16.mxu0 0
      %717 = vmatpush1.bf16.msra.mxu0 0
      %718 = vmatprep.subr.bf16.mxu0 0
      %719 = vmatpush1.bf16.msra.mxu0 0
      %720 = vmatprep.subr.bf16.mxu0 0
      %721 = vmatpush1.bf16.msra.mxu0 0
      %722 = vmatprep.subr.bf16.mxu0 0
      %723 = vmatpush1.bf16.msra.mxu0 0
      %724 = vmatprep.subr.bf16.mxu0 0
      %725 = vmatpush1.bf16.msra.mxu0 0
      %726 = vmatprep.subr.bf16.mxu0 0
      %727 = vmatpush1.bf16.msra.mxu0 0
      %728 = vmatprep.subr.bf16.mxu0 0
      %729 = vmatpush1.bf16.msra.mxu0 0
      %730 = vmatprep.mubr.bf16.mxu0 0
      %731 = vmatmul.mubr.bf16.gmra.mrb[0].mxu0 %v675
      %v732 = vpop.f32.mrb[0].mxu0
      %v733 = vadd.f32 %v647, %v732
      %v734 = vpop.f32.mrb[0].mxu0
      %v735 = vpop.f32.mrb[0].mxu0
      %v736 = vadd.f32 %v647, %v735
      %v737 = vpop.f32.mrb[0].mxu0
      %738 = vmatprep.mubr.bf16.mxu0 0
      %739 = vmatmul.mubr.bf16.gmra.mrb[0].mxu0 %v678
      %v740 = vpop.f32.mrb[0].mxu0
      %v741 = vadd.f32 %v647, %v740
      %v742 = vpop.f32.mrb[0].mxu0
      %v743 = vpop.f32.mrb[0].mxu0
      %v744 = vadd.f32 %v647, %v743
      %v745 = vpop.f32.mrb[0].mxu0
      %746 = vmatprep.mubr.bf16.mxu0 0
      %747 = vmatmul.mubr.bf16.gmra.mrb[0].mxu0 %v681
      %v748 = vpop.f32.mrb[0].mxu0
      %v749 = vadd.f32 %v647, %v748
      %v750 = vpop.f32.mrb[0].mxu0
      %v751 = vpop.f32.mrb[0].mxu0
      %v752 = vadd.f32 %v647, %v751
      %v753 = vpop.f32.mrb[0].mxu0
      %754 = vmatprep.mubr.bf16.mxu0 0
      %755 = vmatmul.mubr.bf16.gmra.mrb[0].mxu0 %v684
      %v756 = vpop.f32.mrb[0].mxu0
      %v757 = vadd.f32 %v647, %v756
      %v758 = vpop.f32.mrb[0].mxu0
      %v759 = vpop.f32.mrb[0].mxu0
      %v760 = vadd.f32 %v647, %v759
      %v761 = vpop.f32.mrb[0].mxu0
      %762 = vmatprep.mubr.bf16.mxu0 0
      %763 = vmatmul.mubr.bf16.gmra.mrb[0].mxu0 %v687
      %v764 = vpop.f32.mrb[0].mxu0
      %v765 = vadd.f32 %v647, %v764
      %v766 = vpop.f32.mrb[0].mxu0
      %v767 = vpop.f32.mrb[0].mxu0
      %v768 = vadd.f32 %v647, %v767
      %v769 = vpop.f32.mrb[0].mxu0
      %770 = vmatprep.mubr.bf16.mxu0 0
      %771 = vmatmul.mubr.bf16.gmra.mrb[0].mxu0 %v690
      %v772 = vpop.f32.mrb[0].mxu0
      %v773 = vadd.f32 %v647, %v772
      %v774 = vpop.f32.mrb[0].mxu0
      %v775 = vpop.f32.mrb[0].mxu0
      %v776 = vadd.f32 %v647, %v775
      %v777 = vpop.f32.mrb[0].mxu0
      %778 = vmatprep.mubr.bf16.mxu0 0
      %779 = vmatmul.mubr.bf16.gmra.mrb[0].mxu0 %v693
      %v780 = vpop.f32.mrb[0].mxu0
      %v781 = vadd.f32 %v647, %v780
      %v782 = vpop.f32.mrb[0].mxu0
      %v783 = vpop.f32.mrb[0].mxu0
      %v784 = vadd.f32 %v647, %v783
      %v785 = vpop.f32.mrb[0].mxu0
      %786 = vmatprep.mubr.bf16.mxu0 0
      %787 = vmatmul.mubr.bf16.gmra.mrb[0].mxu0 %v696
      %v788 = vpop.f32.mrb[0].mxu0
      %v789 = vadd.f32 %v647, %v788
      %v790 = vpop.f32.mrb[0].mxu0
      %v791 = vpop.f32.mrb[0].mxu0
      %v792 = vadd.f32 %v647, %v791
      %v793 = vpop.f32.mrb[0].mxu0
      %794 = vdwg.mxu0
      %v795 = vmul.f32 %v733, 0.5
      %v796 = vmul.f32 %v736, 0.5
      %v797 = vmul.f32 %v741, 0.5
      %v798 = vmul.f32 %v744, 0.5
      %v799 = vmul.f32 %v749, 0.5
      %v800 = vmul.f32 %v752, 0.5
      %v801 = vmul.f32 %v757, 0.5
      %v802 = vmul.f32 %v760, 0.5
      %v803 = vmul.f32 %v765, 0.5
      %v804 = vmul.f32 %v768, 0.5
      %v805 = vmul.f32 %v773, 0.5
      %v806 = vmul.f32 %v776, 0.5
      %v807 = vmul.f32 %v781, 0.5
      %v808 = vmul.f32 %v784, 0.5
      %v809 = vmul.f32 %v789, 0.5
      %v810 = vmul.f32 %v792, 0.5
      %v811 = vmul.f32 %v733, %v733
      %v812 = vmul.f32 %v736, %v736
      %v813 = vmul.f32 %v741, %v741
      %v814 = vmul.f32 %v744, %v744
      %v815 = vmul.f32 %v749, %v749
      %v816 = vmul.f32 %v752, %v752
      %v817 = vmul.f32 %v757, %v757
      %v818 = vmul.f32 %v760, %v760
      %v819 = vmul.f32 %v765, %v765
      %v820 = vmul.f32 %v768, %v768
      %v821 = vmul.f32 %v773, %v773
      %v822 = vmul.f32 %v776, %v776
      %v823 = vmul.f32 %v781, %v781
      %v824 = vmul.f32 %v784, %v784
      %v825 = vmul.f32 %v789, %v789
      %v826 = vmul.f32 %v792, %v792
      %v827 = vmul.f32 %v811, %v733
      %v828 = vmul.f32 %v812, %v736
      %v829 = vmul.f32 %v813, %v741
      %v830 = vmul.f32 %v814, %v744
      %v831 = vmul.f32 %v815, %v749
      %v832 = vmul.f32 %v816, %v752
      %v833 = vmul.f32 %v817, %v757
      %v834 = vmul.f32 %v818, %v760
      %v835 = vmul.f32 %v819, %v765
      %v836 = vmul.f32 %v820, %v768
      %v837 = vmul.f32 %v821, %v773
      %v838 = vmul.f32 %v822, %v776
      %v839 = vmul.f32 %v823, %v781
      %v840 = vmul.f32 %v824, %v784
      %v841 = vmul.f32 %v825, %v789
      %v842 = vmul.f32 %v826, %v792
      %v843 = vmul.f32 %v827, 0.044715
      %v844 = vmul.f32 %v828, 0.044715
      %v845 = vmul.f32 %v829, 0.044715
      %v846 = vmul.f32 %v830, 0.044715
      %v847 = vmul.f32 %v831, 0.044715
      %v848 = vmul.f32 %v832, 0.044715
      %v849 = vmul.f32 %v833, 0.044715
      %v850 = vmul.f32 %v834, 0.044715
      %v851 = vmul.f32 %v835, 0.044715
      %v852 = vmul.f32 %v836, 0.044715
      %v853 = vmul.f32 %v837, 0.044715
      %v854 = vmul.f32 %v838, 0.044715
      %v855 = vmul.f32 %v839, 0.044715
      %v856 = vmul.f32 %v840, 0.044715
      %v857 = vmul.f32 %v841, 0.044715
      %v858 = vmul.f32 %v842, 0.044715
      %v859 = vadd.f32 %v733, %v843
      %v860 = vadd.f32 %v736, %v844
      %v861 = vadd.f32 %v741, %v845
      %v862 = vadd.f32 %v744, %v846
      %v863 = vadd.f32 %v749, %v847
      %v864 = vadd.f32 %v752, %v848
      %v865 = vadd.f32 %v757, %v849
      %v866 = vadd.f32 %v760, %v850
      %v867 = vadd.f32 %v765, %v851
      %v868 = vadd.f32 %v768, %v852
      %v869 = vadd.f32 %v773, %v853
      %v870 = vadd.f32 %v776, %v854
      %v871 = vadd.f32 %v781, %v855
      %v872 = vadd.f32 %v784, %v856
      %v873 = vadd.f32 %v789, %v857
      %v874 = vadd.f32 %v792, %v858
      %v875 = vmul.f32 %v859, 0.7978846
      %v876 = vmul.f32 %v860, 0.7978846
      %v877 = vmul.f32 %v861, 0.7978846
      %v878 = vmul.f32 %v862, 0.7978846
      %v879 = vmul.f32 %v863, 0.7978846
      %v880 = vmul.f32 %v864, 0.7978846
      %v881 = vmul.f32 %v865, 0.7978846
      %v882 = vmul.f32 %v866, 0.7978846
      %v883 = vmul.f32 %v867, 0.7978846
      %v884 = vmul.f32 %v868, 0.7978846
      %v885 = vmul.f32 %v869, 0.7978846
      %v886 = vmul.f32 %v870, 0.7978846
      %v887 = vmul.f32 %v871, 0.7978846
      %v888 = vmul.f32 %v872, 0.7978846
      %v889 = vmul.f32 %v873, 0.7978846
      %v890 = vmul.f32 %v874, 0.7978846
      %v891 = vtanh.pop %v875
      %v892 = vtanh.pop %v876
      %v893 = vtanh.pop %v877
      %v894 = vtanh.pop %v878
      %v895 = vtanh.pop %v879
      %v896 = vtanh.pop %v880
      %v897 = vtanh.pop %v881
      %v898 = vtanh.pop %v882
      %v899 = vtanh.pop %v883
      %v900 = vtanh.pop %v884
      %v901 = vtanh.pop %v885
      %v902 = vtanh.pop %v886
      %v903 = vtanh.pop %v887
      %v904 = vtanh.pop %v888
      %v905 = vtanh.pop %v889
      %v906 = vtanh.pop %v890
      %v907 = vadd.f32 %v891, 1.0
      %v908 = vadd.f32 %v892, 1.0
      %v909 = vadd.f32 %v893, 1.0
      %v910 = vadd.f32 %v894, 1.0
      %v911 = vadd.f32 %v895, 1.0
      %v912 = vadd.f32 %v896, 1.0
      %v913 = vadd.f32 %v897, 1.0
      %v914 = vadd.f32 %v898, 1.0
      %v915 = vadd.f32 %v899, 1.0
      %v916 = vadd.f32 %v900, 1.0
      %v917 = vadd.f32 %v901, 1.0
      %v918 = vadd.f32 %v902, 1.0
      %v919 = vadd.f32 %v903, 1.0
      %v920 = vadd.f32 %v904, 1.0
      %v921 = vadd.f32 %v905, 1.0
      %v922 = vadd.f32 %v906, 1.0
      %v923 = vmul.f32 %v795, %v907
      %v924 = vmul.f32 %v796, %v908
      %v925 = vmul.f32 %v797, %v909
      %v926 = vmul.f32 %v798, %v910
      %v927 = vmul.f32 %v799, %v911
      %v928 = vmul.f32 %v800, %v912
      %v929 = vmul.f32 %v801, %v913
      %v930 = vmul.f32 %v802, %v914
      %v931 = vmul.f32 %v803, %v915
      %v932 = vmul.f32 %v804, %v916
      %v933 = vmul.f32 %v805, %v917
      %v934 = vmul.f32 %v806, %v918
      %v935 = vmul.f32 %v807, %v919
      %v936 = vmul.f32 %v808, %v920
      %v937 = vmul.f32 %v809, %v921
      %v938 = vmul.f32 %v810, %v922
      %v939 = vpack.c.bf16 %v924, %v923
      %v940 = vpack.c.bf16 %v926, %v925
      %v941 = vpack.c.bf16 %v928, %v927
      %v942 = vpack.c.bf16 %v930, %v929
      %v943 = vpack.c.bf16 %v932, %v931
      %v944 = vpack.c.bf16 %v934, %v933
      %v945 = vpack.c.bf16 %v936, %v935
      %v946 = vpack.c.bf16 %v938, %v937
      %v947 = vld [vmem:[%s5] sm:$0xf]
      %v948 = vld [vmem:[%s5 + $0x4] sm:$0xf]
      %v949 = vld [vmem:[%s5 + $0x8] sm:$0xf]
      %v950 = vld [vmem:[%s5 + $0xc] sm:$0xf]
      %v951 = vld [vmem:[%s5 + $0x10] sm:$0xf]
      %v952 = vld [vmem:[%s5 + $0x14] sm:$0xf]
      %v953 = vld [vmem:[%s5 + $0x18] sm:$0xf]
      %v954 = vld [vmem:[%s5 + $0x1c] sm:$0xf]
      %v955 = vld [vmem:[%s6] sm:$0x1]
      %v957 = vlaneseq
      %v958 = vshrl.u32 %v957, 7
      %v959 = vsub.s32 0, %v958
      %v960 = vrot.slane %v955, %v959
      %v970 = vunpack.c.l.b16 %v947
      %v971 = vunpack.c.l.b16 %v948
      %v972 = vunpack.c.l.b16 %v949
      %v973 = vunpack.c.l.b16 %v950
      %v974 = vunpack.c.l.b16 %v951
      %v975 = vunpack.c.l.b16 %v952
      %v976 = vunpack.c.l.b16 %v953
      %v977 = vunpack.c.l.b16 %v954
      %v978 = vpack.c.b16 %v971, %v970
      %v979 = vpack.c.b16 %v973, %v972
      %v980 = vpack.c.b16 %v975, %v974
      %v981 = vpack.c.b16 %v977, %v976
      %v987 = vsel %vm673, %v939, 0
      %v990 = vsel %vm673, %v940, 0
      %v993 = vsel %vm673, %v941, 0
      %v996 = vsel %vm673, %v942, 0
      %v999 = vsel %vm673, %v943, 0
      %v1002 = vsel %vm673, %v944, 0
      %v1005 = vsel %vm673, %v945, 0
      %v1008 = vsel %vm673, %v946, 0
      %1010 = vmatprep.subr.bf16.mxu0 0
      %1011 = vmatpush1.bf16.msra.mxu0 %v978
      %1012 = vmatprep.subr.bf16.mxu0 0
      %1013 = vmatpush1.bf16.msra.mxu0 %v979
      %1014 = vmatprep.subr.bf16.mxu0 0
      %1015 = vmatpush1.bf16.msra.mxu0 %v980
      %1016 = vmatprep.subr.bf16.mxu0 0
      %1017 = vmatpush1.bf16.msra.mxu0 %v981
      %1018 = vmatprep.subr.bf16.mxu0 0
      %1019 = vmatpush1.bf16.msra.mxu0 0
      %1020 = vmatprep.subr.bf16.mxu0 0
      %1021 = vmatpush1.bf16.msra.mxu0 0
      %1022 = vmatprep.subr.bf16.mxu0 0
      %1023 = vmatpush1.bf16.msra.mxu0 0
      %1024 = vmatprep.subr.bf16.mxu0 0
      %1025 = vmatpush1.bf16.msra.mxu0 0
      %1026 = vmatprep.subr.bf16.mxu0 0
      %1027 = vmatpush1.bf16.msra.mxu0 0
      %1028 = vmatprep.subr.bf16.mxu0 0
      %1029 = vmatpush1.bf16.msra.mxu0 0
      %1030 = vmatprep.subr.bf16.mxu0 0
      %1031 = vmatpush1.bf16.msra.mxu0 0
      %1032 = vmatprep.subr.bf16.mxu0 0
      %1033 = vmatpush1.bf16.msra.mxu0 0
      %1034 = vmatprep.subr.bf16.mxu0 0
      %1035 = vmatpush1.bf16.msra.mxu0 0
      %1036 = vmatprep.subr.bf16.mxu0 0
      %1037 = vmatpush1.bf16.msra.mxu0 0
      %1038 = vmatprep.subr.bf16.mxu0 0
      %1039 = vmatpush1.bf16.msra.mxu0 0
      %1040 = vmatprep.subr.bf16.mxu0 0
      %1041 = vmatpush1.bf16.msra.mxu0 0
      %1042 = vmatprep.mubr.bf16.mxu0 0
      %1043 = vmatmul.mubr.bf16.gmra.mrb[0].mxu0 %v987
      %v1044 = vpop.f32.mrb[0].mxu0
      %v1045 = vadd.f32 %v960, %v1044
      %v1046 = vpop.f32.mrb[0].mxu0
      %v1047 = vpop.f32.mrb[0].mxu0
      %v1048 = vadd.f32 %v960, %v1047
      %v1049 = vpop.f32.mrb[0].mxu0
      %1050 = vmatprep.mubr.bf16.mxu0 0
      %1051 = vmatmul.mubr.bf16.gmra.mrb[0].mxu0 %v990
      %v1052 = vpop.f32.mrb[0].mxu0
      %v1053 = vadd.f32 %v960, %v1052
      %v1054 = vpop.f32.mrb[0].mxu0
      %v1055 = vpop.f32.mrb[0].mxu0
      %v1056 = vadd.f32 %v960, %v1055
      %v1057 = vpop.f32.mrb[0].mxu0
      %1058 = vmatprep.mubr.bf16.mxu0 0
      %1059 = vmatmul.mubr.bf16.gmra.mrb[0].mxu0 %v993
      %v1060 = vpop.f32.mrb[0].mxu0
      %v1061 = vadd.f32 %v960, %v1060
      %v1062 = vpop.f32.mrb[0].mxu0
      %v1063 = vpop.f32.mrb[0].mxu0
      %v1064 = vadd.f32 %v960, %v1063
      %v1065 = vpop.f32.mrb[0].mxu0
      %1066 = vmatprep.mubr.bf16.mxu0 0
      %1067 = vmatmul.mubr.bf16.gmra.mrb[0].mxu0 %v996
      %v1068 = vpop.f32.mrb[0].mxu0
      %v1069 = vadd.f32 %v960, %v1068
      %v1070 = vpop.f32.mrb[0].mxu0
      %v1071 = vpop.f32.mrb[0].mxu0
      %v1072 = vadd.f32 %v960, %v1071
      %v1073 = vpop.f32.mrb[0].mxu0
      %1074 = vmatprep.mubr.bf16.mxu0 0
      %1075 = vmatmul.mubr.bf16.gmra.mrb[0].mxu0 %v999
      %v1076 = vpop.f32.mrb[0].mxu0
      %v1077 = vadd.f32 %v960, %v1076
      %v1078 = vpop.f32.mrb[0].mxu0
      %v1079 = vpop.f32.mrb[0].mxu0
      %v1080 = vadd.f32 %v960, %v1079
      %v1081 = vpop.f32.mrb[0].mxu0
      %1082 = vmatprep.mubr.bf16.mxu0 0
      %1083 = vmatmul.mubr.bf16.gmra.mrb[0].mxu0 %v1002
      %v1084 = vpop.f32.mrb[0].mxu0
      %v1085 = vadd.f32 %v960, %v1084
      %v1086 = vpop.f32.mrb[0].mxu0
      %v1087 = vpop.f32.mrb[0].mxu0
      %v1088 = vadd.f32 %v960, %v1087
      %v1089 = vpop.f32.mrb[0].mxu0
      %1090 = vmatprep.mubr.bf16.mxu0 0
      %1091 = vmatmul.mubr.bf16.gmra.mrb[0].mxu0 %v1005
      %v1092 = vpop.f32.mrb[0].mxu0
      %v1093 = vadd.f32 %v960, %v1092
      %v1094 = vpop.f32.mrb[0].mxu0
      %v1095 = vpop.f32.mrb[0].mxu0
      %v1096 = vadd.f32 %v960, %v1095
      %v1097 = vpop.f32.mrb[0].mxu0
      %1098 = vmatprep.mubr.bf16.mxu0 0
      %1099 = vmatmul.mubr.bf16.gmra.mrb[0].mxu0 %v1008
      %v1100 = vpop.f32.mrb[0].mxu0
      %v1101 = vadd.f32 %v960, %v1100
      %v1102 = vpop.f32.mrb[0].mxu0
      %v1103 = vpop.f32.mrb[0].mxu0
      %v1104 = vadd.f32 %v960, %v1103
      %v1105 = vpop.f32.mrb[0].mxu0
      %1106 = vdwg.mxu0
      %v1107 = vxor.u32 %v1045, 2147483648
      %v1108 = vxor.u32 %v1048, 2147483648
      %v1109 = vxor.u32 %v1053, 2147483648
      %v1110 = vxor.u32 %v1056, 2147483648
      %v1111 = vxor.u32 %v1061, 2147483648
      %v1112 = vxor.u32 %v1064, 2147483648
      %v1113 = vxor.u32 %v1069, 2147483648
      %v1114 = vxor.u32 %v1072, 2147483648
      %v1115 = vxor.u32 %v1077, 2147483648
      %v1116 = vxor.u32 %v1080, 2147483648
      %v1117 = vxor.u32 %v1085, 2147483648
      %v1118 = vxor.u32 %v1088, 2147483648
      %v1119 = vxor.u32 %v1093, 2147483648
      %v1120 = vxor.u32 %v1096, 2147483648
      %v1121 = vxor.u32 %v1101, 2147483648
      %v1122 = vxor.u32 %v1104, 2147483648
      %v1123 = vmul.f32 %v1107, 1.442695
      %v1124 = vpow.pop %v1123
      %v1125 = vmul.f32 %v1108, 1.442695
      %v1126 = vpow.pop %v1125
      %v1127 = vmul.f32 %v1109, 1.442695
      %v1128 = vpow.pop %v1127
      %v1129 = vmul.f32 %v1110, 1.442695
      %v1130 = vpow.pop %v1129
      %v1131 = vmul.f32 %v1111, 1.442695
      %v1132 = vpow.pop %v1131
      %v1133 = vmul.f32 %v1112, 1.442695
      %v1134 = vpow.pop %v1133
      %v1135 = vmul.f32 %v1113, 1.442695
      %v1136 = vpow.pop %v1135
      %v1137 = vmul.f32 %v1114, 1.442695
      %v1138 = vpow.pop %v1137
      %v1139 = vmul.f32 %v1115, 1.442695
      %v1140 = vpow.pop %v1139
      %v1141 = vmul.f32 %v1116, 1.442695
      %v1142 = vpow.pop %v1141
      %v1143 = vmul.f32 %v1117, 1.442695
      %v1144 = vpow.pop %v1143
      %v1145 = vmul.f32 %v1118, 1.442695
      %v1146 = vpow.pop %v1145
      %v1147 = vmul.f32 %v1119, 1.442695
      %v1148 = vpow.pop %v1147
      %v1149 = vmul.f32 %v1120, 1.442695
      %v1150 = vpow.pop %v1149
      %v1151 = vmul.f32 %v1121, 1.442695
      %v1152 = vpow.pop %v1151
      %v1153 = vmul.f32 %v1122, 1.442695
      %v1154 = vpow.pop %v1153
      %v1155 = vadd.f32 %v1124, 1.0
      %v1156 = vadd.f32 %v1126, 1.0
      %v1157 = vadd.f32 %v1128, 1.0
      %v1158 = vadd.f32 %v1130, 1.0
      %v1159 = vadd.f32 %v1132, 1.0
      %v1160 = vadd.f32 %v1134, 1.0
      %v1161 = vadd.f32 %v1136, 1.0
      %v1162 = vadd.f32 %v1138, 1.0
      %v1163 = vadd.f32 %v1140, 1.0
      %v1164 = vadd.f32 %v1142, 1.0
      %v1165 = vadd.f32 %v1144, 1.0
      %v1166 = vadd.f32 %v1146, 1.0
      %v1167 = vadd.f32 %v1148, 1.0
      %v1168 = vadd.f32 %v1150, 1.0
      %v1169 = vadd.f32 %v1152, 1.0
      %v1170 = vadd.f32 %v1154, 1.0
      %v1171 = vrcp.pop %v1155
      %v1172 = vmul.f32 1.0, %v1171
      %v1173 = vrcp.pop %v1156
      %v1174 = vmul.f32 1.0, %v1173
      %v1175 = vrcp.pop %v1157
      %v1176 = vmul.f32 1.0, %v1175
      %v1177 = vrcp.pop %v1158
      %v1178 = vmul.f32 1.0, %v1177
      %v1179 = vrcp.pop %v1159
      %v1180 = vmul.f32 1.0, %v1179
      %v1181 = vrcp.pop %v1160
      %v1182 = vmul.f32 1.0, %v1181
      %v1183 = vrcp.pop %v1161
      %v1184 = vmul.f32 1.0, %v1183
      %v1185 = vrcp.pop %v1162
      %v1186 = vmul.f32 1.0, %v1185
      %v1187 = vrcp.pop %v1163
      %v1188 = vmul.f32 1.0, %v1187
      %v1189 = vrcp.pop %v1164
      %v1190 = vmul.f32 1.0, %v1189
      %v1191 = vrcp.pop %v1165
      %v1192 = vmul.f32 1.0, %v1191
      %v1193 = vrcp.pop %v1166
      %v1194 = vmul.f32 1.0, %v1193
      %v1195 = vrcp.pop %v1167
      %v1196 = vmul.f32 1.0, %v1195
      %v1197 = vrcp.pop %v1168
      %v1198 = vmul.f32 1.0, %v1197
      %v1199 = vrcp.pop %v1169
      %v1200 = vmul.f32 1.0, %v1199
      %v1201 = vrcp.pop %v1170
      %v1202 = vmul.f32 1.0, %v1201
      %vm1203 = vcmask 23552
      %1204 = vst.msk [vmem:[%s280] sm:$0xff] %vm1203, %v1172
      %1205 = vst.msk [vmem:[%s280 + $0x8] sm:$0xff] %vm1203, %v1174
      %1206 = vst.msk [vmem:[%s280 + $0x10] sm:$0xff] %vm1203, %v1176
      %1207 = vst.msk [vmem:[%s280 + $0x18] sm:$0xff] %vm1203, %v1178
      %1208 = vst.msk [vmem:[%s280 + $0x20] sm:$0xff] %vm1203, %v1180
      %1209 = vst.msk [vmem:[%s280 + $0x28] sm:$0xff] %vm1203, %v1182
      %1210 = vst.msk [vmem:[%s280 + $0x30] sm:$0xff] %vm1203, %v1184
      %1211 = vst.msk [vmem:[%s280 + $0x38] sm:$0xff] %vm1203, %v1186
      %1212 = vst.msk [vmem:[%s280 + $0x40] sm:$0xff] %vm1203, %v1188
      %1213 = vst.msk [vmem:[%s280 + $0x48] sm:$0xff] %vm1203, %v1190
      %1214 = vst.msk [vmem:[%s280 + $0x50] sm:$0xff] %vm1203, %v1192
      %1215 = vst.msk [vmem:[%s280 + $0x58] sm:$0xff] %vm1203, %v1194
      %1216 = vst.msk [vmem:[%s280 + $0x60] sm:$0xff] %vm1203, %v1196
      %1217 = vst.msk [vmem:[%s280 + $0x68] sm:$0xff] %vm1203, %v1198
      %1218 = vst.msk [vmem:[%s280 + $0x70] sm:$0xff] %vm1203, %v1200
      %1219 = vst.msk [vmem:[%s280 + $0x78] sm:$0xff] %vm1203, %v1202
      %s1220 = smul.u32 16, %s18
      %p1221 = scmp.lt.s32.totalorder %s1220, 31
      %s1222 = scalar_select %p1221, %s1220, 31
      %s1223 = smul.addr %s1222, 8
      %s1224 = scalar_lea.vmem %s7, %s1223
      // Predicated region
      $region49: #{tpu_custom_call.1} parent=47 // pred_check
        %p1225 = pneg %p188
      $region50: #{tpu_custom_call.1} parent=47 // pred_check_branch
        %1227 = sbr.rel (%p1225) target = $region52
      $region51: #{tpu_custom_call.1} parent=47 // pred_region
        %s1228 = smul.u32 16, %s18
      $region52: #{tpu_custom_call.1} parent=47 // pred_fallthru
        _
    $region48: #{tpu_custom_call.1} parent=5 // pred_fallthru
      _
    %p1229 = scmp.le.s32.totalorder 2, %s13
    // Predicated region
    $region53: #{tpu_custom_call.1} parent=5 // pred_check
      %p1230 = pneg %p1229
    $region54: #{tpu_custom_call.1} parent=5 // pred_check_branch
      %1232 = sbr.rel (%p1230) target = $region56
    $region55: #{tpu_custom_call.1} parent=5 // pred_region
      %s1233 = ssub.s32 %s13, 2
      // Predicated region
      $region57: #{tpu_custom_call.1} parent=55 // pred_check
        %p1234 = pneg %p194
      $region58: #{tpu_custom_call.1} parent=55 // pred_check_branch
        %1236 = sbr.rel (%p1234) target = $region60
      $region59: #{tpu_custom_call.1} parent=55 // pred_region
        %s1237 = smul.u32 16, %s19
        %p1238 = scmp.lt.s32.totalorder %s1237, 31
        %s1239 = scalar_select %p1238, %s1237, 31
        %s1240 = smul.addr %s1239, 8
        %s1241 = scalar_lea.vmem %s7, %s1240
      $region60: #{tpu_custom_call.1} parent=55 // pred_fallthru
        _
    $region56: #{tpu_custom_call.1} parent=5 // pred_fallthru
      _
  $region6: #{tpu_custom_call.1} parent=0 // loop_footer
    %s17 = sadd.s32 1, %s13
  $region7: #{tpu_custom_call.1} parent=0 // loop_footer_branch
    %12 = sbr.rel target = $region3
  $region8: #{tpu_custom_call.1} parent=0 // loop_exit
    _

</llo_original>
